<compile_context>
chip_gen: v5e
topology: v5e:2x2
jax: 0.10.0
libtpu: 0.0.40
codegen_flags: <defaults>
</compile_context>

<pallas_src>
import numpy as np
import jax
import jax.numpy as jnp
from jax.experimental import pallas as pl
from jax.experimental.pallas import tpu as pltpu


# ---------------- deterministic 2D sin-cos positional embedding ----------------
def _get_1d_sincos(embed_dim, pos):
    omega = np.arange(embed_dim // 2, dtype=np.float64)
    omega /= embed_dim / 2.0
    omega = 1.0 / 10000 ** omega
    pos = pos.reshape(-1)
    out = np.einsum("m,d->md", pos, omega)
    return np.concatenate([np.sin(out), np.cos(out)], axis=1)


def get_2d_sincos_pos_embed(embed_dim, grid_size, cls_token=False):
    grid_h = np.arange(grid_size, dtype=np.float32)
    grid_w = np.arange(grid_size, dtype=np.float32)
    grid = np.meshgrid(grid_w, grid_h)
    grid = np.stack(grid, axis=0).reshape([2, 1, grid_size, grid_size])
    emb_h = _get_1d_sincos(embed_dim // 2, grid[0])
    emb_w = _get_1d_sincos(embed_dim // 2, grid[1])
    pos = np.concatenate([emb_h, emb_w], axis=1)
    if cls_token:
        pos = np.concatenate([np.zeros([1, embed_dim]), pos], axis=0)
    return pos.astype(np.float32)


# ---------------- helpers ----------------
def _round_up(x, m):
    return ((x + m - 1) // m) * m


def _choose_block_batch(N, T_pad, P_pad, D, vmem_budget_bytes=20 << 20):
    """Largest per-step sample count B that divides N, fits a conservative VMEM
    budget (double-buffered bf16 patches + f32 pos + f32 out), and keeps >= 2
    grid steps so both v7x TensorCores get work (harmless on v5e/v6e)."""
    per_sample = 2 * (T_pad * P_pad * 2 + T_pad * D * 4 + T_pad * D * 4)
    max_b = max(1, vmem_budget_bytes // per_sample)
    best = 1
    for b in range(1, N + 1):
        if N % b != 0 or b > max_b:
            continue
        if (N // b >= 2) or (N == 1):
            best = b
    return best


# ---------------- Pallas kernel ----------------
def _embed_ln_kernel(x_ref, pos_ref, w_ref, lnw_ref, lnb_ref, out_ref):
    # (B*T_pad, P_pad) bf16 @ (P_pad, D) bf16 -> f32 on the MXU
    emb = jnp.dot(x_ref[...], w_ref[...], preferred_element_type=jnp.float32)
    # pos rows already carry: conv bias (kept-token rows) / cls+pos_cls (row 0)
    emb = emb + pos_ref[...]
    # LayerNorm over D (eps=1e-5, biased variance, weight/bias as in PyTorch LN)
    mean = jnp.mean(emb, axis=-1, keepdims=True)
    cen = emb - mean
    var = jnp.mean(cen * cen, axis=-1, keepdims=True)
    normed = cen * jax.lax.rsqrt(var + 1e-5)
    out_ref[...] = (normed * lnw_ref[...] + lnb_ref[...]).astype(out_ref.dtype)


# ---------------- wrapper ----------------
def masking_strategy_forward(imgs, mask_ratio, params, patch_size, rng_key):
    N, C, H, W = imgs.shape
    p = patch_size
    h = H // p
    L = h * h
    P = C * p * p
    D = params["w_mat"].shape[1]
    K = int(L * (1 - mask_ratio))          # len_keep
    T = K + 1                              # +cls
    T_pad = _round_up(T, 8)                # sublane-dense output rows
    P_pad = _round_up(P, 128)              # lane-dense contraction dim

    # --- glue: patchify NCHW -> (N, L, P) in (c, i, j) order (matches Conv2d weight) ---
    x = imgs.reshape(N, C, h, p, h, p)
    x = jnp.transpose(x, (0, 2, 4, 1, 3, 5))            # (N, h, w, C, p, p)
    patches = x.reshape(N, L, P).astype(jnp.float32)

    # --- glue: per-sample random shuffle (argsort of noise), mask, ids_restore ---
    # TODO(synk): jax.random.uniform + argsort does not reproduce torch.rand shuffles bit-for-bit.
    noise = jax.random.uniform(rng_key, (N, L))
    ids_shuffle = jnp.argsort(noise, axis=1)
    ids_restore = jnp.argsort(ids_shuffle, axis=1)
    ids_keep = ids_shuffle[:, :K]
    mask = jnp.ones((N, L), jnp.float32).at[:, :K].set(0.0)
    mask = jnp.take_along_axis(mask, ids_restore, axis=1)

    # --- glue: gather BEFORE the matmul (only kept tokens reach the kernel) ---
    patches_keep = jnp.take_along_axis(patches, ids_keep[:, :, None], axis=1)   # (N, K, P)
    pos_keep = params["pos_patch"][ids_keep] + params["b"]                      # (N, K, D)  bias folded
    cls_row = (params["cls"] + params["pos_cls"])[0]                            # (D,)

    # --- glue: build dense padded token streams ---
    patches_tok = jnp.zeros((N, T_pad, P_pad), jnp.float32)
    patches_tok = patches_tok.at[:, 1:T, :P].set(patches_keep)   # row 0 = cls (zero patch)
    pos_tok = jnp.zeros((N, T_pad, D), jnp.float32)
    pos_tok = pos_tok.at[:, 0, :].set(cls_row)
    pos_tok = pos_tok.at[:, 1:T, :].set(pos_keep)

    patches_flat = patches_tok.reshape(N * T_pad, P_pad).astype(jnp.bfloat16)
    pos_flat = pos_tok.reshape(N * T_pad, D)
    w_pad = jnp.zeros((P_pad, D), jnp.float32).at[:P, :].set(params["w_mat"]).astype(jnp.bfloat16)

    # --- kernel launch: B samples per grid step ---
    B = _choose_block_batch(N, T_pad, P_pad, D)
    R = B * T_pad                                         # rows per grid step
    grid_spec = pltpu.PrefetchScalarGridSpec(
        num_scalar_prefetch=0,
        grid=(N // B,),
        in_specs=[
            pl.BlockSpec((R, P_pad), lambda n: (n, 0)),   # padded patch rows (bf16)
            pl.BlockSpec((R, D), lambda n: (n, 0)),       # pos (+bias / cls) rows (f32)
            pl.BlockSpec((P_pad, D), lambda n: (0, 0)),   # patch-embed weight (bf16)
            pl.BlockSpec((1, D), lambda n: (0, 0)),       # LayerNorm weight
            pl.BlockSpec((1, D), lambda n: (0, 0)),       # LayerNorm bias
        ],
        out_specs=pl.BlockSpec((R, D), lambda n: (n, 0)),
    )

    out_flat = pl.pallas_call(
        _embed_ln_kernel,
        out_shape=jax.ShapeDtypeStruct((N * T_pad, D), jnp.float32),
        grid_spec=grid_spec,
        compiler_params=pltpu.CompilerParams(dimension_semantics=("parallel",)),
    )(patches_flat, pos_flat, w_pad, params["ln_w"], params["ln_b"])

    x_out = out_flat.reshape(N, T_pad, D)[:, :T, :]       # drop sublane padding rows
    return x_out, mask, ids_restore


if __name__ == "__main__":
    # Small shapes consistent with the module: img 16x16, patch 4, 3 chans, D=128.
    img_size, patch_size, in_chans, embed_dim = 16, 4, 3, 128
    N = 2
    mask_ratio = 0.75
    p = patch_size
    h = img_size // p
    L = h * h
    P = in_chans * p * p

    key = jax.random.PRNGKey(0)
    k_img, k_w, k_cls, k_noise = jax.random.split(key, 4)

    imgs = jax.random.normal(k_img, (N, in_chans, img_size, img_size), jnp.float32)

    # patch-embed conv weight: xavier_uniform on the (D, C*p*p) view (as in the module)
    fan_in, fan_out = P, embed_dim
    limit = float(np.sqrt(6.0 / (fan_in + fan_out)))
    w_conv = jax.random.uniform(k_w, (embed_dim, in_chans, p, p), jnp.float32,
                                -limit, limit)
    w_mat = jnp.transpose(w_conv.reshape(embed_dim, P))          # (P, D)
    b = jnp.zeros((1, embed_dim), jnp.float32)                   # conv bias

    pos = get_2d_sincos_pos_embed(embed_dim, h, cls_token=True)  # (L+1, D), fixed sincos
    pos_cls = jnp.asarray(pos[:1])
    pos_patch = jnp.asarray(pos[1:])

    cls_tok = 0.02 * jax.random.normal(k_cls, (1, embed_dim), jnp.float32)
    ln_w = jnp.ones((1, embed_dim), jnp.float32)                 # LayerNorm init per _init_weights
    ln_b = jnp.zeros((1, embed_dim), jnp.float32)

    params = dict(w_mat=w_mat, b=b, pos_patch=pos_patch, pos_cls=pos_cls,
                  cls=cls_tok, ln_w=ln_w, ln_b=ln_b)

    x_out, mask, ids_restore = masking_strategy_forward(
        imgs, mask_ratio, params, patch_size, k_noise)
    jax.block_until_ready((x_out, mask, ids_restore))

    len_keep = int(L * (1 - mask_ratio))
    assert x_out.shape == (N, len_keep + 1, embed_dim)
    assert mask.shape == (N, L)
    assert ids_restore.shape == (N, L)
    assert bool(jnp.all(jnp.isfinite(x_out)))
    # mask has exactly L - len_keep ones per sample
    assert bool(jnp.all(jnp.sum(mask, axis=1) == (L - len_keep)))
    print("KERNEL_OK")
</pallas_src>

<mosaic_0001>
module attributes {stable_mosaic.version = 11 : i64} {
  func.func @_embed_ln_kernel(%arg0: i32, %arg1: memref<8x128xbf16, #tpu.memory_space<vmem>>, %arg2: memref<8x128xf32, #tpu.memory_space<vmem>>, %arg3: memref<128x128xbf16, #tpu.memory_space<vmem>>, %arg4: memref<1x128xf32, #tpu.memory_space<vmem>>, %arg5: memref<1x128xf32, #tpu.memory_space<vmem>>, %arg6: memref<8x128xf32, #tpu.memory_space<vmem>>) attributes {dimension_semantics = [#tpu.dimension_semantics<parallel>], iteration_bounds = array<i64: 2>, scalar_prefetch = 0 : i64, scratch_operands = 0 : i64, tpu.core_type = #tpu.core_type<tc>, window_params = [{transform_indices = @transform_0, window_bounds = array<i64: 8, 128>}, {transform_indices = @transform_1, window_bounds = array<i64: 8, 128>}, {pipeline_mode = #tpu.pipeline_mode<synchronous>, transform_indices = @transform_2, window_bounds = array<i64: 128, 128>}, {pipeline_mode = #tpu.pipeline_mode<synchronous>, transform_indices = @transform_3, window_bounds = array<i64: 1, 128>}, {pipeline_mode = #tpu.pipeline_mode<synchronous>, transform_indices = @transform_4, window_bounds = array<i64: 1, 128>}, {transform_indices = @transform_5, window_bounds = array<i64: 8, 128>}]} {
    %c0 = arith.constant 0 : index
    %c0_0 = arith.constant 0 : index
    %0 = vector.load %arg1[%c0, %c0_0] : memref<8x128xbf16, #tpu.memory_space<vmem>>, vector<8x128xbf16>
    %c0_1 = arith.constant 0 : index
    %c0_2 = arith.constant 0 : index
    %1 = vector.load %arg3[%c0_1, %c0_2] : memref<128x128xbf16, #tpu.memory_space<vmem>>, vector<128x128xbf16>
    %cst = arith.constant dense<0.000000e+00> : vector<8x128xf32>
    %2 = tpu.matmul %0, %1, %cst {dimension_numbers = #tpu.dot_dimension_numbers<[1], [0], [0], [1], [0, 0, 1, 1], [], []>} : vector<8x128xbf16>, vector<128x128xbf16>, vector<8x128xf32> -> vector<8x128xf32>
    %c0_3 = arith.constant 0 : index
    %c0_4 = arith.constant 0 : index
    %3 = vector.load %arg2[%c0_3, %c0_4] : memref<8x128xf32, #tpu.memory_space<vmem>>, vector<8x128xf32>
    %4 = arith.addf %2, %3 : vector<8x128xf32>
    %cst_5 = arith.constant dense<0.000000e+00> : vector<8xf32>
    %5 = vector.multi_reduction <add>, %4, %cst_5 [1] : vector<8x128xf32> to vector<8xf32>
    %6 = vector.shape_cast %5 : vector<8xf32> to vector<8x1xf32>
    %cst_6 = arith.constant 1.280000e+02 : f32
    %7 = vector.broadcast %cst_6 : f32 to vector<8x1xf32>
    %8 = arith.divf %6, %7 : vector<8x1xf32>
    %9 = vector.broadcast %8 : vector<8x1xf32> to vector<8x128xf32>
    %10 = arith.subf %4, %9 : vector<8x128xf32>
    %11 = arith.mulf %10, %10 : vector<8x128xf32>
    %cst_7 = arith.constant dense<0.000000e+00> : vector<8xf32>
    %12 = vector.multi_reduction <add>, %11, %cst_7 [1] : vector<8x128xf32> to vector<8xf32>
    %13 = vector.shape_cast %12 : vector<8xf32> to vector<8x1xf32>
    %cst_8 = arith.constant 1.280000e+02 : f32
    %14 = vector.broadcast %cst_8 : f32 to vector<8x1xf32>
    %15 = arith.divf %13, %14 : vector<8x1xf32>
    %cst_9 = arith.constant 9.99999974E-6 : f32
    %16 = vector.broadcast %cst_9 : f32 to vector<8x1xf32>
    %17 = arith.addf %15, %16 : vector<8x1xf32>
    %18 = math.rsqrt %17 : vector<8x1xf32>
    %19 = vector.broadcast %18 : vector<8x1xf32> to vector<8x128xf32>
    %20 = arith.mulf %10, %19 : vector<8x128xf32>
    %c0_10 = arith.constant 0 : index
    %c0_11 = arith.constant 0 : index
    %21 = vector.load %arg4[%c0_10, %c0_11] : memref<1x128xf32, #tpu.memory_space<vmem>>, vector<1x128xf32>
    %22 = vector.broadcast %21 : vector<1x128xf32> to vector<8x128xf32>
    %23 = arith.mulf %20, %22 : vector<8x128xf32>
    %c0_12 = arith.constant 0 : index
    %c0_13 = arith.constant 0 : index
    %24 = vector.load %arg5[%c0_12, %c0_13] : memref<1x128xf32, #tpu.memory_space<vmem>>, vector<1x128xf32>
    %25 = vector.broadcast %24 : vector<1x128xf32> to vector<8x128xf32>
    %26 = arith.addf %23, %25 : vector<8x128xf32>
    %c0_14 = arith.constant 0 : index
    %c0_15 = arith.constant 0 : index
    %27 = vector.load %arg6[%c0_14, %c0_15] : memref<8x128xf32, #tpu.memory_space<vmem>>, vector<8x128xf32>
    tpu.vector_store %arg6[%c0_14, %c0_15], %26 {strides = array<i32>} : memref<8x128xf32, #tpu.memory_space<vmem>>, vector<8x128xf32>,
    return
  }
  func.func @transform_0(%arg0: i32) -> (i32, i32) {
    %c0_i32 = arith.constant 0 : i32
    %c0_i32_0 = arith.constant 0 : i32
    return %arg0, %c0_i32 : i32, i32
  }
  func.func @transform_1(%arg0: i32) -> (i32, i32) {
    %c0_i32 = arith.constant 0 : i32
    %c0_i32_0 = arith.constant 0 : i32
    return %arg0, %c0_i32 : i32, i32
  }
  func.func @transform_2(%arg0: i32) -> (i32, i32) {
    %c0_i32 = arith.constant 0 : i32
    %c0_i32_0 = arith.constant 0 : i32
    %c0_i32_1 = arith.constant 0 : i32
    return %c0_i32, %c0_i32_0 : i32, i32
  }
  func.func @transform_3(%arg0: i32) -> (i32, i32) {
    %c0_i32 = arith.constant 0 : i32
    %c0_i32_0 = arith.constant 0 : i32
    %c0_i32_1 = arith.constant 0 : i32
    return %c0_i32, %c0_i32_0 : i32, i32
  }
  func.func @transform_4(%arg0: i32) -> (i32, i32) {
    %c0_i32 = arith.constant 0 : i32
    %c0_i32_0 = arith.constant 0 : i32
    %c0_i32_1 = arith.constant 0 : i32
    return %c0_i32, %c0_i32_0 : i32, i32
  }
  func.func @transform_5(%arg0: i32) -> (i32, i32) {
    %c0_i32 = arith.constant 0 : i32
    %c0_i32_0 = arith.constant 0 : i32
    return %arg0, %c0_i32 : i32, i32
  }
}

</mosaic_0001>

<llo_original>
// kernel: tpu_custom_call.1
$region0: #{tpu_custom_call.1}
  #allocation0 [shape = 'u32[]', space=smem, size = 0x4, offset = 0x4, fixed_abs, tag = 'smem constant byte address 0x4 - core index']
  #allocation1 [shape = 'u32[72,128]{1,0:T(1,128)}', space=vmem, size = 0x9000, scoped, tag = 'internal scratch']
  %s0 = inlined_call_operand.hbm [shape: bf16[16,128], index: 0, kind: input, shape index: {}]
  %s1 = inlined_call_operand.hbm [shape: f32[16,128], index: 1, kind: input, shape index: {}]
  %s2 = inlined_call_operand.hbm [shape: bf16[128,128], index: 2, kind: input, shape index: {}]
  %s3 = inlined_call_operand.vmem [shape: f32[1,128], index: 3, kind: input, shape index: {}]
  %s4 = inlined_call_operand.vmem [shape: f32[1,128], index: 4, kind: input, shape index: {}]
  %s5 = inlined_call_operand.hbm [shape: f32[16,128], index: 5, kind: output, shape index: {}]
  %s6 = sld [smem:[#allocation0]]
  $region65: #{tpu_custom_call.1} parent=0
    _
  %s8 = ssub.s32 1, %s6
  %s9 = scalar_select 0, %s8, %s6
  $region1: #{tpu_custom_call.1} parent=0
    #allocation2 [shape = 'u8[4096]{0}', space=vmem, size = 0x1000, scoped, tag = 'input window, operand 0']
    #allocation3 [shape = 's32[2]{0}', space=sflag, size = 0x8, scoped, tag = 'scoped memory for tpu_custom_call.1']
    #allocation4 [shape = 's32[2]{0}', space=sflag, size = 0x8, scoped, tag = 'scoped memory for tpu_custom_call.1']
    #allocation5 [shape = 'u8[8192]{0}', space=vmem, size = 0x2000, scoped, tag = 'input window, operand 1']
    #allocation6 [shape = 's32[2]{0}', space=sflag, size = 0x8, scoped, tag = 'scoped memory for tpu_custom_call.1']
    #allocation7 [shape = 'u8[32768]{0}', space=vmem, size = 0x8000, scoped, tag = 'input window, operand 2, single buffered']
    #allocation8 [shape = 'u8[8192]{0}', space=vmem, size = 0x2000, scoped, tag = 'output window, operand 0']
    %10 = vsyncpa [#allocation3], 0
    %s11 = scalar_lea.sflag [#allocation3], 1
    %12 = vsyncpa %s11, 0
    %13 = vsyncpa [#allocation6], 0
    %s14 = scalar_lea.sflag [#allocation6], 1
    %15 = vsyncpa %s14, 0
    %16 = vsyncpa [#allocation4], 0
    %s17 = scalar_lea.sflag [#allocation4], 1
    %18 = vsyncpa %s17, 0
    loop: start=0, step=1, limit=4
    $region2: #{tpu_custom_call.1} parent=1 // loop_pre_header
      _
    $region3: #{tpu_custom_call.1} parent=1 // loop_header
      %s20 = sphi 0, %s24
      %p21 = scmp.ge.s32.totalorder %s20, 4
      %s30 = sphi 0, %s32
      %s33 = sphi 0, %s30
      %s34 = sphi 0, %s33
      %s50 = sphi 0, %s34
      %s56 = sphi 0, %s58
      %s59 = sphi 0, %s56
      %s60 = sphi 0, %s59
      %s76 = sphi 0, %s60
      %s80 = sphi 0, %s80
      %s82 = sphi 0, %s80
      %s83 = sphi 0, %s82
      %s97 = sphi 0, %s83
      %s101 = sphi 0, %s101
      %s103 = sphi 0, %s101
      %s104 = sphi 0, %s103
      %s118 = sphi 0, %s104
      %s122 = sphi 0, %s122
      %s124 = sphi 0, %s122
      %s125 = sphi 0, %s124
      %s139 = sphi 0, %s125
      %s145 = sphi 0, %s147
      %s148 = sphi 0, %s145
      %s149 = sphi 0, %s148
      %s165 = sphi 0, %s149
    $region4: #{tpu_custom_call.1} parent=1 // loop_header_branch
      %23 = sbr.rel (%p21) target = $region8
    $region5: #{tpu_custom_call.1} parent=1 // loop_body
      %s25 = ssub.s32 %s20, 1
      %s26 = ssub.s32 %s20, 2
      %s27 = sadd.s32 %s20, 1
      %s28 = ssub.s32 %s20, %s27
      %p29 = scmp.eq.s32.totalorder %s28, 0
      %s31 = sadd.s32 %s30, 1
      %s32 = scalar_select %p29, %s30, %s31
      %p35 = pneg %p29
      %p36 = scmp.eq.s32.totalorder %s20, 1
      %p37 = por %p35, %p36
      %p38 = scmp.ne.s32.totalorder %s30, %s33
      %p39 = scmp.eq.s32.totalorder %s20, 0
      %p40 = por %p38, %p39
      %p41 = scmp.ne.s32.totalorder %s30, %s33
      %p42 = scmp.eq.s32.totalorder %s25, 1
      %p43 = por %p41, %p42
      %p44 = scmp.ne.s32.totalorder %s33, %s34
      %p45 = scmp.eq.s32.totalorder %s25, 0
      %p46 = por %p44, %p45
      %p47 = scmp.ne.s32.totalorder %s33, %s34
      %p48 = scmp.eq.s32.totalorder %s26, 1
      %p49 = por %p47, %p48
      %p51 = scmp.ne.s32.totalorder %s34, %s50
      %p52 = scmp.eq.s32.totalorder %s26, 0
      %p53 = por %p51, %p52
      %s54 = ssub.s32 %s20, %s27
      %p55 = scmp.eq.s32.totalorder %s54, 0
      %s57 = sadd.s32 %s56, 1
      %s58 = scalar_select %p55, %s56, %s57
      %p61 = pneg %p55
      %p62 = scmp.eq.s32.totalorder %s20, 1
      %p63 = por %p61, %p62
      %p64 = scmp.ne.s32.totalorder %s56, %s59
      %p65 = scmp.eq.s32.totalorder %s20, 0
      %p66 = por %p64, %p65
      %p67 = scmp.ne.s32.totalorder %s56, %s59
      %p68 = scmp.eq.s32.totalorder %s25, 1
      %p69 = por %p67, %p68
      %p70 = scmp.ne.s32.totalorder %s59, %s60
      %p71 = scmp.eq.s32.totalorder %s25, 0
      %p72 = por %p70, %p71
      %p73 = scmp.ne.s32.totalorder %s59, %s60
      %p74 = scmp.eq.s32.totalorder %s26, 1
      %p75 = por %p73, %p74
      %p77 = scmp.ne.s32.totalorder %s60, %s76
      %p78 = scmp.eq.s32.totalorder %s26, 0
      %p79 = por %p77, %p78
      %s81 = sadd.s32 %s80, 1
      %p84 = scmp.eq.s32.totalorder %s20, 1
      %p85 = scmp.ne.s32.totalorder %s80, %s82
      %p86 = scmp.eq.s32.totalorder %s20, 0
      %p87 = por %p85, %p86
      %p88 = scmp.ne.s32.totalorder %s80, %s82
      %p89 = scmp.eq.s32.totalorder %s25, 1
      %p90 = por %p88, %p89
      %p91 = scmp.ne.s32.totalorder %s82, %s83
      %p92 = scmp.eq.s32.totalorder %s25, 0
      %p93 = por %p91, %p92
      %p94 = scmp.ne.s32.totalorder %s82, %s83
      %p95 = scmp.eq.s32.totalorder %s26, 1
      %p96 = por %p94, %p95
      %p98 = scmp.ne.s32.totalorder %s83, %s97
      %p99 = scmp.eq.s32.totalorder %s26, 0
      %p100 = por %p98, %p99
      %s102 = sadd.s32 %s101, 1
      %p105 = scmp.eq.s32.totalorder %s20, 1
      %p106 = scmp.ne.s32.totalorder %s101, %s103
      %p107 = scmp.eq.s32.totalorder %s20, 0
      %p108 = por %p106, %p107
      %p109 = scmp.ne.s32.totalorder %s101, %s103
      %p110 = scmp.eq.s32.totalorder %s25, 1
      %p111 = por %p109, %p110
      %p112 = scmp.ne.s32.totalorder %s103, %s104
      %p113 = scmp.eq.s32.totalorder %s25, 0
      %p114 = por %p112, %p113
      %p115 = scmp.ne.s32.totalorder %s103, %s104
      %p116 = scmp.eq.s32.totalorder %s26, 1
      %p117 = por %p115, %p116
      %p119 = scmp.ne.s32.totalorder %s104, %s118
      %p120 = scmp.eq.s32.totalorder %s26, 0
      %p121 = por %p119, %p120
      %s123 = sadd.s32 %s122, 1
      %p126 = scmp.eq.s32.totalorder %s20, 1
      %p127 = scmp.ne.s32.totalorder %s122, %s124
      %p128 = scmp.eq.s32.totalorder %s20, 0
      %p129 = por %p127, %p128
      %p130 = scmp.ne.s32.totalorder %s122, %s124
      %p131 = scmp.eq.s32.totalorder %s25, 1
      %p132 = por %p130, %p131
      %p133 = scmp.ne.s32.totalorder %s124, %s125
      %p134 = scmp.eq.s32.totalorder %s25, 0
      %p135 = por %p133, %p134
      %p136 = scmp.ne.s32.totalorder %s124, %s125
      %p137 = scmp.eq.s32.totalorder %s26, 1
      %p138 = por %p136, %p137
      %p140 = scmp.ne.s32.totalorder %s125, %s139
      %p141 = scmp.eq.s32.totalorder %s26, 0
      %p142 = por %p140, %p141
      %s143 = ssub.s32 %s20, %s27
      %p144 = scmp.eq.s32.totalorder %s143, 0
      %s146 = sadd.s32 %s145, 1
      %s147 = scalar_select %p144, %s145, %s146
      %p150 = pneg %p144
      %p151 = scmp.eq.s32.totalorder %s20, 1
      %p152 = por %p150, %p151
      %p153 = scmp.ne.s32.totalorder %s145, %s148
      %p154 = scmp.eq.s32.totalorder %s20, 0
      %p155 = por %p153, %p154
      %p156 = scmp.ne.s32.totalorder %s145, %s148
      %p157 = scmp.eq.s32.totalorder %s25, 1
      %p158 = por %p156, %p157
      %p159 = scmp.ne.s32.totalorder %s148, %s149
      %p160 = scmp.eq.s32.totalorder %s25, 0
      %p161 = por %p159, %p160
      %p162 = scmp.ne.s32.totalorder %s148, %s149
      %p163 = scmp.eq.s32.totalorder %s26, 1
      %p164 = por %p162, %p163
      %p166 = scmp.ne.s32.totalorder %s149, %s165
      %p167 = scmp.eq.s32.totalorder %s26, 0
      %p168 = por %p166, %p167
      %p169 = scmp.le.s32.totalorder 1, %s20
      %p170 = scmp.lt.s32.totalorder %s20, 3
      %p171 = pnand %p169, %p170
      %p172 = pneg %p171
      // Predicated region
      $region9: #{tpu_custom_call.1} parent=5 // pred_check
        _
      $region10: #{tpu_custom_call.1} parent=5 // pred_check_branch
        %174 = sbr.rel (%p171) target = $region12
      $region11: #{tpu_custom_call.1} parent=5 // pred_region
        %s175 = ssub.s32 %s20, 1
        // Predicated region
        $region13: #{tpu_custom_call.1} parent=11 // pred_check
          %p176 = pneg %p93
        $region14: #{tpu_custom_call.1} parent=11 // pred_check_branch
          %178 = sbr.rel (%p176) target = $region16
        $region15: #{tpu_custom_call.1} parent=11 // pred_region
          %180 = vsyncadd [#allocation6], 0
          %s181 = sshll.u32 %s2, 4
          %s182 = int_to_ptr.hbm [resolvable:$true] %s181
          %s183 = sshll.u32 [#allocation7], 4
          %s184 = int_to_ptr.vmem [resolvable:$true] %s183
          %189 = dma.hbm_to_vmem [thread:$0]  %s182, 1024, %s184, [#allocation6], 64, 64, 4
        $region16: #{tpu_custom_call.1} parent=11 // pred_fallthru
          _
        // Predicated region
        $region17: #{tpu_custom_call.1} parent=11 // pred_check
          %p190 = pneg %p114
        $region18: #{tpu_custom_call.1} parent=11 // pred_check_branch
          %192 = sbr.rel (%p190) target = $region20
        $region19: #{tpu_custom_call.1} parent=11 // pred_region
          _
        $region20: #{tpu_custom_call.1} parent=11 // pred_fallthru
          _
        // Predicated region
        $region21: #{tpu_custom_call.1} parent=11 // pred_check
          %p193 = pneg %p135
        $region22: #{tpu_custom_call.1} parent=11 // pred_check_branch
          %195 = sbr.rel (%p193) target = $region24
        $region23: #{tpu_custom_call.1} parent=11 // pred_region
          _
        $region24: #{tpu_custom_call.1} parent=11 // pred_fallthru
          _
      $region12: #{tpu_custom_call.1} parent=5 // pred_fallthru
        _
      %p196 = scmp.lt.s32.totalorder %s20, 2
      // Predicated region
      $region25: #{tpu_custom_call.1} parent=5 // pred_check
        %p197 = pneg %p196
      $region26: #{tpu_custom_call.1} parent=5 // pred_check_branch
        %199 = sbr.rel (%p197) target = $region28
      $region27: #{tpu_custom_call.1} parent=5 // pred_region
        // Predicated region
        $region29: #{tpu_custom_call.1} parent=27 // pred_check
          %p200 = pneg %p40
        $region30: #{tpu_custom_call.1} parent=27 // pred_check_branch
          %202 = sbr.rel (%p200) target = $region32
        $region31: #{tpu_custom_call.1} parent=27 // pred_region
          %s203 = sand.u32 %s30, 1
          %s204 = scalar_lea.sflag [#allocation3], %s203
          %s205 = sand.u32 %s30, 1
          %s206 = smul.addr %s205, 4
          %s207 = scalar_lea.vmem [#allocation2], %s206
          %209 = vsyncadd %s204, 0
          %s210 = smul.addr %s20, 4
          %s211 = scalar_lea.hbm %s0, %s210
          %s213 = sshll.u32 %s211, 4
          %s214 = int_to_ptr.hbm [resolvable:$true] %s213
          %s215 = sshll.u32 %s207, 4
          %s216 = int_to_ptr.vmem [resolvable:$true] %s215
          %218 = dma.hbm_to_vmem [thread:$0]  %s214, 64, %s216, %s204
        $region32: #{tpu_custom_call.1} parent=27 // pred_fallthru
          _
        // Predicated region
        $region33: #{tpu_custom_call.1} parent=27 // pred_check
          %p219 = pneg %p66
        $region34: #{tpu_custom_call.1} parent=27 // pred_check_branch
          %221 = sbr.rel (%p219) target = $region36
        $region35: #{tpu_custom_call.1} parent=27 // pred_region
          %s222 = sand.u32 %s20, 1
          %s223 = scalar_lea.sflag [#allocation6], %s222
          %s224 = sand.u32 %s56, 1
          %s225 = smul.addr %s224, 8
          %s226 = scalar_lea.vmem [#allocation5], %s225
          %228 = vsyncadd %s223, 0
          %s229 = smul.addr %s20, 8
          %s230 = scalar_lea.hbm %s1, %s229
          %s232 = sshll.u32 %s230, 4
          %s233 = int_to_ptr.hbm [resolvable:$true] %s232
          %s234 = sshll.u32 %s226, 4
          %s235 = int_to_ptr.vmem [resolvable:$true] %s234
          %237 = dma.hbm_to_vmem [thread:$0]  %s233, 128, %s235, %s223
        $region36: #{tpu_custom_call.1} parent=27 // pred_fallthru
          _
      $region28: #{tpu_custom_call.1} parent=5 // pred_fallthru
        _
      %p238 = scmp.le.s32.totalorder 1, %s20
      %p239 = scmp.lt.s32.totalorder %s20, 3
      %p240 = pnand %p238, %p239
      %p241 = pneg %p240
      // Predicated region
      $region37: #{tpu_custom_call.1} parent=5 // pred_check
        _
      $region38: #{tpu_custom_call.1} parent=5 // pred_check_branch
        %243 = sbr.rel (%p240) target = $region40
      $region39: #{tpu_custom_call.1} parent=5 // pred_region
        %s244 = ssub.s32 %s20, 1
        %s245 = sand.u32 %s33, 1
        %s246 = scalar_lea.sflag [#allocation3], %s245
        %s247 = sand.u32 %s33, 1
        %s248 = smul.addr %s247, 4
        %s249 = scalar_lea.vmem [#allocation2], %s248
        // Predicated region
        $region41: #{tpu_custom_call.1} parent=39 // pred_check
          %p250 = pneg %p46
        $region42: #{tpu_custom_call.1} parent=39 // pred_check_branch
          %252 = sbr.rel (%p250) target = $region44
        $region43: #{tpu_custom_call.1} parent=39 // pred_region
          %254 = dma.done %s246, 64
        $region44: #{tpu_custom_call.1} parent=39 // pred_fallthru
          _
        %s255 = sand.u32 %s25, 1
        %s256 = scalar_lea.sflag [#allocation6], %s255
        %s257 = sand.u32 %s59, 1
        %s258 = smul.addr %s257, 8
        %s259 = scalar_lea.vmem [#allocation5], %s258
        // Predicated region
        $region45: #{tpu_custom_call.1} parent=39 // pred_check
          %p260 = pneg %p72
        $region46: #{tpu_custom_call.1} parent=39 // pred_check_branch
          %262 = sbr.rel (%p260) target = $region48
        $region47: #{tpu_custom_call.1} parent=39 // pred_region
          %264 = dma.done %s256, 128
        $region48: #{tpu_custom_call.1} parent=39 // pred_fallthru
          _
        // Predicated region
        $region49: #{tpu_custom_call.1} parent=39 // pred_check
          %p265 = pneg %p93
        $region50: #{tpu_custom_call.1} parent=39 // pred_check_branch
          %267 = sbr.rel (%p265) target = $region52
        $region51: #{tpu_custom_call.1} parent=39 // pred_region
          %269 = dma.done [#allocation6], 1024
        $region52: #{tpu_custom_call.1} parent=39 // pred_fallthru
          _
        %s270 = sand.u32 %s33, 1
        %s271 = scalar_lea.sflag [#allocation3], %s270
        %s272 = sand.u32 %s33, 1
        %s273 = smul.addr %s272, 4
        %s274 = scalar_lea.vmem [#allocation2], %s273
        %p275 = pneg %p46
        %p276 = pneg %p43
        %s277 = sand.u32 %s25, 1
        %s278 = scalar_lea.sflag [#allocation6], %s277
        %s279 = sand.u32 %s59, 1
        %s280 = smul.addr %s279, 8
        %s281 = scalar_lea.vmem [#allocation5], %s280
        %p282 = pneg %p72
        %p283 = pneg %p69
        %p284 = pneg %p93
        %p285 = pneg %p90
        %p286 = pneg %p114
        %p287 = pneg %p111
        %p288 = pneg %p135
        %p289 = pneg %p132
        %p290 = pneg %p161
        %p291 = pneg %p158
        %s292 = sand.u32 %s148, 1
        %s293 = scalar_lea.sflag [#allocation4], %s292
        %s294 = sand.u32 %s148, 1
        %s295 = smul.addr %s294, 8
        %s296 = scalar_lea.vmem [#allocation8], %s295
        %v297 = vld [vmem:[%s249] sm:$0xf]
        %v298 = vld [vmem:[#allocation7] sm:$0xf]
        %v299 = vld [vmem:[#allocation7 + $0x4] sm:$0xf]
        %v300 = vld [vmem:[#allocation7 + $0x8] sm:$0xf]
        %v301 = vld [vmem:[#allocation7 + $0xc] sm:$0xf]
        %v302 = vld [vmem:[#allocation7 + $0x10] sm:$0xf]
        %v303 = vld [vmem:[#allocation7 + $0x14] sm:$0xf]
        %v304 = vld [vmem:[#allocation7 + $0x18] sm:$0xf]
        %v305 = vld [vmem:[#allocation7 + $0x1c] sm:$0xf]
        %v306 = vld [vmem:[#allocation7 + $0x20] sm:$0xf]
        %v307 = vld [vmem:[#allocation7 + $0x24] sm:$0xf]
        %v308 = vld [vmem:[#allocation7 + $0x28] sm:$0xf]
        %v309 = vld [vmem:[#allocation7 + $0x2c] sm:$0xf]
        %v310 = vld [vmem:[#allocation7 + $0x30] sm:$0xf]
        %v311 = vld [vmem:[#allocation7 + $0x34] sm:$0xf]
        %v312 = vld [vmem:[#allocation7 + $0x38] sm:$0xf]
        %v313 = vld [vmem:[#allocation7 + $0x3c] sm:$0xf]
        %v314 = vld [vmem:[%s259] sm:$0xff]
        %v331 = vunpack.c.l.b16 %v298
        %v332 = vunpack.c.l.b16 %v299
        %v333 = vunpack.c.l.b16 %v300
        %v334 = vunpack.c.l.b16 %v301
        %v335 = vunpack.c.l.b16 %v302
        %v336 = vunpack.c.l.b16 %v303
        %v337 = vunpack.c.l.b16 %v304
        %v338 = vunpack.c.l.b16 %v305
        %v339 = vunpack.c.l.b16 %v306
        %v340 = vunpack.c.l.b16 %v307
        %v341 = vunpack.c.l.b16 %v308
        %v342 = vunpack.c.l.b16 %v309
        %v343 = vunpack.c.l.b16 %v310
        %v344 = vunpack.c.l.b16 %v311
        %v345 = vunpack.c.l.b16 %v312
        %v346 = vunpack.c.l.b16 %v313
        %v347 = vpack.c.b16 %v332, %v331
        %v348 = vpack.c.b16 %v334, %v333
        %v349 = vpack.c.b16 %v336, %v335
        %v350 = vpack.c.b16 %v338, %v337
        %v351 = vpack.c.b16 %v340, %v339
        %v352 = vpack.c.b16 %v342, %v341
        %v353 = vpack.c.b16 %v344, %v343
        %v354 = vpack.c.b16 %v346, %v345
        %363 = vmatpush.bf16.msra.mxu0 %v354
        %364 = vmatpush.bf16.msra.mxu0 %v353
        %365 = vmatpush.bf16.msra.mxu0 %v352
        %366 = vmatpush.bf16.msra.mxu0 %v351
        %367 = vmatpush.bf16.msra.mxu0 %v350
        %368 = vmatpush.bf16.msra.mxu0 %v349
        %369 = vmatpush.bf16.msra.mxu0 %v348
        %370 = vmatpush.bf16.msra.mxu0 %v347
        %371 = vmatmul.bf16.gmra.mxu0 %v297
        %v372 = vpop.f32.mrf.mxu0
        %v373 = vadd.f32 %v314, %v372
        %v374 = vpop.f32.mrf.mxu0
        %375 = vdwg.mxu0
        %376 = vadd.xlane.f32.xlu0 %v373
        %v377 = vpop.xlane.xlu0 %376
        %v378 = vrcp.pop 128.0
        %v379 = vmul.f32 128.0, %v378
        %v380 = vsub.f32 1.0, %v379
        %v381 = vmul.f32 %v378, %v380
        %v382 = vadd.f32 %v378, %v381
        %vm383 = vweird.f32 %v378
        %v384 = vsel %vm383, %v378, %v382
        %v385 = vmul.f32 %v377, %v384
        %v386 = vsub.f32 %v373, %v385
        %v387 = vmul.f32 %v386, %v386
        %388 = vadd.xlane.f32.xlu0 %v387
        %v389 = vpop.xlane.xlu0 %388
        %v390 = vmul.f32 %v389, %v384
        %v391 = vadd.f32 %v390, 1e-05
        %v392 = vrsqrt.pop %v391
        %v393 = vmul.f32 %v392, %v391
        %v394 = vmul.f32 %v393, %v392
        %v395 = vmul.f32 0.5, %v394
        %v396 = vsub.f32 1.5, %v395
        %v397 = vmul.f32 %v392, %v396
        %vm398 = vweird.f32 %v391
        %vm399 = vweird.f32 %v392
        %vm400 = vmor %vm398, %vm399
        %v401 = vsel %vm400, %v392, %v397
        %v402 = vmul.f32 %v386, %v401
        %v403 = vld [vmem:[%s3] sm:$0x1]
        %v405 = vperm.slane %v403, 0
        %v407 = vmul.f32 %v402, %v405
        %v408 = vld [vmem:[%s4] sm:$0x1]
        %v410 = vperm.slane %v408, 0
        %v412 = vadd.f32 %v407, %v410
        %413 = vst [vmem:[%s296] sm:$0xff] %v412
        %s414 = sand.u32 %s148, 1
        %s415 = scalar_lea.sflag [#allocation4], %s414
        %s416 = sand.u32 %s148, 1
        %s417 = smul.addr %s416, 8
        %s418 = scalar_lea.vmem [#allocation8], %s417
        // Predicated region
        $region53: #{tpu_custom_call.1} parent=39 // pred_check
          %p419 = pneg %p158
        $region54: #{tpu_custom_call.1} parent=39 // pred_check_branch
          %421 = sbr.rel (%p419) target = $region56
        $region55: #{tpu_custom_call.1} parent=39 // pred_region
          %423 = vsyncadd %s415, 0
          %s424 = smul.addr %s25, 8
          %s425 = scalar_lea.hbm %s5, %s424
          %s427 = sshll.u32 %s418, 4
          %s428 = int_to_ptr.vmem [resolvable:$true] %s427
          %s429 = sshll.u32 %s425, 4
          %s430 = int_to_ptr.hbm [resolvable:$true] %s429
          %432 = dma.vmem_to_hbm [thread:$0]  %s428, 128, %s430, %s415
        $region56: #{tpu_custom_call.1} parent=39 // pred_fallthru
          _
      $region40: #{tpu_custom_call.1} parent=5 // pred_fallthru
        _
      %p433 = scmp.le.s32.totalorder 2, %s20
      // Predicated region
      $region57: #{tpu_custom_call.1} parent=5 // pred_check
        %p434 = pneg %p433
      $region58: #{tpu_custom_call.1} parent=5 // pred_check_branch
        %436 = sbr.rel (%p434) target = $region60
      $region59: #{tpu_custom_call.1} parent=5 // pred_region
        %s437 = ssub.s32 %s20, 2
        // Predicated region
        $region61: #{tpu_custom_call.1} parent=59 // pred_check
          %p438 = pneg %p164
        $region62: #{tpu_custom_call.1} parent=59 // pred_check_branch
          %440 = sbr.rel (%p438) target = $region64
        $region63: #{tpu_custom_call.1} parent=59 // pred_region
          %s441 = sand.u32 %s149, 1
          %s442 = scalar_lea.sflag [#allocation4], %s441
          %s443 = sand.u32 %s149, 1
          %s444 = smul.addr %s443, 8
          %s445 = scalar_lea.vmem [#allocation8], %s444
          %447 = dma.done %s442, 128
        $region64: #{tpu_custom_call.1} parent=59 // pred_fallthru
          _
      $region60: #{tpu_custom_call.1} parent=5 // pred_fallthru
        _
    $region6: #{tpu_custom_call.1} parent=1 // loop_footer
      %s24 = sadd.s32 1, %s20
    $region7: #{tpu_custom_call.1} parent=1 // loop_footer_branch
      %19 = sbr.rel target = $region3
    $region8: #{tpu_custom_call.1} parent=1 // loop_exit
      _
    %448 = vsyncpa [#allocation3], 1
    %s449 = scalar_lea.sflag [#allocation3], 1
    %450 = vsyncpa %s449, 1
    %451 = vsyncpa [#allocation6], 1
    %s452 = scalar_lea.sflag [#allocation6], 1
    %453 = vsyncpa %s452, 1
    %454 = vsyncpa [#allocation4], 1
    %s455 = scalar_lea.sflag [#allocation4], 1
    %456 = vsyncpa %s455, 1

</llo_original>
